<compile_context>
chip_gen: v5e
topology: v5e:2x2
jax: 0.10.0
libtpu: 0.0.40
codegen_flags: <defaults>
</compile_context>

<pallas_src>
import functools

import jax
import jax.numpy as jnp
import numpy as np
from jax.experimental import pallas as pl
from jax.experimental.pallas import tpu as pltpu


def _round_up(x: int, m: int) -> int:
    return ((x + m - 1) // m) * m


def _kd_naive_loss_kernel(qs_ref, ks_hbm, qt_ref, kt_hbm,   # inputs
                          loss_ref,                          # output (SMEM (1,1))
                          ksn_ref, ktn_ref, dma_sem,         # scratch
                          *, inv_temp_student, inv_temp_teacher,
                          n_valid, variant, mask_rows):
    eps = 1e-12  # torch.nn.functional.normalize default eps

    def l2norm(x):
        # x / max(||x||, eps)  ==  x * rsqrt(max(sum(x*x), eps^2))   (EUP rsqrt)
        s = jnp.sum(x * x, axis=-1, keepdims=True)
        return x * jax.lax.rsqrt(jnp.maximum(s, eps * eps))

    i = pl.program_id(0)

    # --- one-time: DMA keys HBM->VMEM, normalize in place, fold 1/temp -------
    @pl.when(i == 0)
    def _init():
        cp_ks = pltpu.make_async_copy(ks_hbm, ksn_ref, dma_sem.at[0])
        cp_kt = pltpu.make_async_copy(kt_hbm, ktn_ref, dma_sem.at[1])
        cp_ks.start()
        cp_kt.start()
        loss_ref[0, 0] = jnp.float32(0.0)
        cp_ks.wait()
        cp_kt.wait()
        ksn_ref[...] = (l2norm(ksn_ref[...].astype(jnp.float32))
                        * inv_temp_student).astype(ksn_ref.dtype)
        ktn_ref[...] = (l2norm(ktn_ref[...].astype(jnp.float32))
                        * inv_temp_teacher).astype(ktn_ref.dtype)

    # --- per-tile: normalized queries -> scaled cosine similarities (MXU) ----
    qs_n = l2norm(qs_ref[...].astype(jnp.float32)).astype(ksn_ref.dtype)
    qt_n = l2norm(qt_ref[...].astype(jnp.float32)).astype(ktn_ref.dtype)

    # contract last dims of both operands: no [M,D]->[D,M] transpose needed.
    contract = (((1,), (1,)), ((), ()))
    sim_s = jax.lax.dot_general(qs_n, ksn_ref[...], contract,
                                preferred_element_type=jnp.float32)
    sim_t = jax.lax.dot_general(qt_n, ktn_ref[...], contract,
                                preferred_element_type=jnp.float32)

    # student: division-free log-softmax
    z_s = sim_s - jnp.max(sim_s, axis=-1, keepdims=True)
    lp_s = z_s - jnp.log(jnp.sum(jnp.exp(z_s), axis=-1, keepdims=True))

    # teacher: exp(z_t) computed once; reused for the softmax denominator,
    # the log-softmax, and (unnormalized) as the KL / CE weight.
    z_t = sim_t - jnp.max(sim_t, axis=-1, keepdims=True)
    e_t = jnp.exp(z_t)
    denom_t = jnp.sum(e_t, axis=-1, keepdims=True)
    lp_t = z_t - jnp.log(denom_t)

    if variant == "kd":
        # kl_div(input=lp_s, target=lp_t, log_target=True): sum p_t*(lp_t-lp_s)
        weighted = e_t * (lp_t - lp_s)
    else:
        # cross_entropy with soft targets softmax(sim_t): sum -p_t*lp_s
        weighted = -e_t * lp_s

    # divide by the teacher denominator once per row.
    row_loss = (jnp.sum(weighted, axis=-1, keepdims=True)
                * pl.reciprocal(denom_t, approx=False))

    if mask_rows:
        # mask rows that only exist because N was padded up to a tile multiple
        tq = row_loss.shape[0]
        row_ids = i * tq + jax.lax.broadcasted_iota(jnp.int32, (tq, 1), 0)
        row_loss = jnp.where(row_ids < n_valid, row_loss, jnp.float32(0.0))

    loss_ref[0, 0] += jnp.sum(row_loss)

    # --- finalize: batchmean / mean -> divide by the global N ----------------
    @pl.when(i == pl.num_programs(0) - 1)
    def _finalize():
        loss_ref[0, 0] = loss_ref[0, 0] * jnp.float32(1.0 / n_valid)


def kd_naive_loss(queries_student, keys_student, queries_teacher, keys_teacher,
                  index=None, *, temp_student=1.0, temp_teacher=1.0,
                  variant="kd", block_q=128):
    """Pallas implementation of KDNaiveLoss.forward. Returns {'loss': scalar}."""
    del index  # unused by the naive (no moving-average) variant
    assert variant in ("kd", "ce")
    assert block_q % 8 == 0

    n, d = queries_student.shape
    m, _ = keys_student.shape

    # query-row tile size (sublane multiple of 8), pad N up to a tile multiple
    tq = min(block_q, _round_up(n, 8))
    n_pad = _round_up(n, tq)
    if n_pad != n:
        pad = ((0, n_pad - n), (0, 0))
        queries_student = jnp.pad(queries_student, pad)
        queries_teacher = jnp.pad(queries_teacher, pad)

    kernel = functools.partial(
        _kd_naive_loss_kernel,
        inv_temp_student=float(1.0 / temp_student),
        inv_temp_teacher=float(1.0 / temp_teacher),
        n_valid=int(n),
        variant=variant,
        mask_rows=(n_pad != n),
    )

    loss = pl.pallas_call(
        kernel,
        out_shape=jax.ShapeDtypeStruct((1, 1), jnp.float32),
        grid_spec=pltpu.PrefetchScalarGridSpec(
            num_scalar_prefetch=0,
            grid=(n_pad // tq,),
            in_specs=[
                pl.BlockSpec((tq, d), lambda i: (i, 0)),     # student queries (tiled)
                pl.BlockSpec(memory_space=pl.ANY),           # student keys (HBM, DMA once)
                pl.BlockSpec((tq, d), lambda i: (i, 0)),     # teacher queries (tiled)
                pl.BlockSpec(memory_space=pl.ANY),           # teacher keys (HBM, DMA once)
            ],
            out_specs=pl.BlockSpec(memory_space=pltpu.MemorySpace.SMEM),
            scratch_shapes=[
                pltpu.VMEM((m, d), keys_student.dtype),      # l2norm(ks) / temp_s (in place)
                pltpu.VMEM((m, d), keys_teacher.dtype),      # l2norm(kt) / temp_t (in place)
                pltpu.SemaphoreType.DMA((2,)),                # key-copy completion sems
            ],
        ),
        compiler_params=pltpu.CompilerParams(
            dimension_semantics=("arbitrary",),       # accumulator across the grid
            vmem_limit_bytes=32 * 1024 * 1024,
        ),
    )(queries_student, keys_student, queries_teacher, keys_teacher)
    return {"loss": loss[0, 0]}


def _reference_loss(qs, ks, qt, kt, temp_s, temp_t, variant="kd"):
    """Pure-JAX reference mirroring the PyTorch module."""
    def l2norm(x):
        nrm = jnp.linalg.norm(x, axis=-1, keepdims=True)
        return x / jnp.maximum(nrm, 1e-12)

    sim_s = l2norm(qs) @ l2norm(ks).T / temp_s
    sim_t = l2norm(qt) @ l2norm(kt).T / temp_t
    lp_s = jax.nn.log_softmax(sim_s, axis=-1)
    lp_t = jax.nn.log_softmax(sim_t, axis=-1)
    if variant == "kd":
        return jnp.sum(jnp.exp(lp_t) * (lp_t - lp_s)) / qs.shape[0]
    return jnp.sum(-jnp.exp(lp_t) * lp_s) / qs.shape[0]


if __name__ == "__main__":
    # N deliberately not a multiple of the query tile -> exercises padding+mask,
    # and block_q=8 forces a multi-step grid with the SMEM loss accumulator.
    N, M, D = 13, 16, 32
    key = jax.random.PRNGKey(0)
    k1, k2, k3, k4 = jax.random.split(key, 4)

    queries_student = jax.random.normal(k1, (N, D), dtype=jnp.float32)
    keys_student = jax.random.normal(k2, (M, D), dtype=jnp.float32)
    queries_teacher = jax.random.normal(k3, (N, D), dtype=jnp.float32)
    keys_teacher = jax.random.normal(k4, (M, D), dtype=jnp.float32)
    index = jnp.arange(N, dtype=jnp.int32)  # unused, matches PyTorch interface

    temp_student, temp_teacher = 0.5, 0.7

    for variant in ("kd", "ce"):
        out = kd_naive_loss(
            queries_student, keys_student, queries_teacher, keys_teacher, index,
            temp_student=temp_student, temp_teacher=temp_teacher,
            variant=variant, block_q=8,
        )
        loss = jax.block_until_ready(out["loss"])
        ref = _reference_loss(queries_student, keys_student,
                              queries_teacher, keys_teacher,
                              temp_student, temp_teacher, variant)
        np.testing.assert_allclose(np.asarray(loss), np.asarray(ref),
                                   rtol=1e-4, atol=1e-5)

    print("KERNEL_OK")
</pallas_src>

<mosaic_0001>
module attributes {stable_mosaic.version = 11 : i64} {
  func.func @_kd_naive_loss_kernel(%arg0: i32, %arg1: memref<8x32xf32, #tpu.memory_space<vmem>>, %arg2: memref<16x32xf32, #tpu.memory_space<any>>, %arg3: memref<8x32xf32, #tpu.memory_space<vmem>>, %arg4: memref<16x32xf32, #tpu.memory_space<any>>, %arg5: memref<1x1xf32, #tpu.memory_space<smem>>, %arg6: memref<16x32xf32, #tpu.memory_space<vmem>>, %arg7: memref<16x32xf32, #tpu.memory_space<vmem>>, %arg8: memref<2x!tpu.dma_semaphore, #tpu.memory_space<semaphore_mem>>) attributes {dimension_semantics = [#tpu.dimension_semantics<arbitrary>], iteration_bounds = array<i64: 2>, scalar_prefetch = 0 : i64, scratch_operands = 3 : i64, tpu.core_type = #tpu.core_type<tc>, window_params = [{transform_indices = @transform_0, window_bounds = array<i64: 8, 32>}, {}, {transform_indices = @transform_2, window_bounds = array<i64: 8, 32>}, {}, {transform_indices = @transform_4, window_bounds = array<i64: 1, 1>}]} {
    %c0_i32 = arith.constant 0 : i32
    %0 = arith.cmpi eq, %arg0, %c0_i32 : i32
    %1 = arith.extui %0 : i1 to i32
    %c0_i32_0 = arith.constant 0 : i32
    %2 = arith.cmpi ne, %1, %c0_i32_0 : i32
    scf.if %2 {
      %c0_i32_25 = arith.constant 0 : i32
      %69 = tpu.memref_slice %arg8[%c0_i32_25] : memref<2x!tpu.dma_semaphore, #tpu.memory_space<semaphore_mem>> -> memref<1x!tpu.dma_semaphore, #tpu.memory_space<semaphore_mem>>
      %70 = tpu.memref_squeeze %69 : memref<1x!tpu.dma_semaphore, #tpu.memory_space<semaphore_mem>> -> memref<!tpu.dma_semaphore, #tpu.memory_space<semaphore_mem>>
      tpu.enqueue_dma source(%arg2 : memref<16x32xf32, #tpu.memory_space<any>>) target(%arg6 : memref<16x32xf32, #tpu.memory_space<vmem>>) target_semaphore(%70 : memref<!tpu.dma_semaphore, #tpu.memory_space<semaphore_mem>>)
      %c1_i32_26 = arith.constant 1 : i32
      %71 = tpu.memref_slice %arg8[%c1_i32_26] : memref<2x!tpu.dma_semaphore, #tpu.memory_space<semaphore_mem>> -> memref<1x!tpu.dma_semaphore, #tpu.memory_space<semaphore_mem>>
      %72 = tpu.memref_squeeze %71 : memref<1x!tpu.dma_semaphore, #tpu.memory_space<semaphore_mem>> -> memref<!tpu.dma_semaphore, #tpu.memory_space<semaphore_mem>>
      tpu.enqueue_dma source(%arg4 : memref<16x32xf32, #tpu.memory_space<any>>) target(%arg7 : memref<16x32xf32, #tpu.memory_space<vmem>>) target_semaphore(%72 : memref<!tpu.dma_semaphore, #tpu.memory_space<semaphore_mem>>)
      %cst_27 = arith.constant 0.000000e+00 : f32
      %c0_28 = arith.constant 0 : index
      %c0_29 = arith.constant 0 : index
      %73 = memref.load %arg5[%c0_28, %c0_29] : memref<1x1xf32, #tpu.memory_space<smem>>
      memref.store %cst_27, %arg5[%c0_28, %c0_29] : memref<1x1xf32, #tpu.memory_space<smem>>
      %c0_i32_30 = arith.constant 0 : i32
      %74 = tpu.memref_slice %arg8[%c0_i32_30] : memref<2x!tpu.dma_semaphore, #tpu.memory_space<semaphore_mem>> -> memref<1x!tpu.dma_semaphore, #tpu.memory_space<semaphore_mem>>
      %75 = tpu.memref_squeeze %74 : memref<1x!tpu.dma_semaphore, #tpu.memory_space<semaphore_mem>> -> memref<!tpu.dma_semaphore, #tpu.memory_space<semaphore_mem>>
      tpu.wait_dma2 semaphore(%75 : memref<!tpu.dma_semaphore, #tpu.memory_space<semaphore_mem>>) src(%arg2 : memref<16x32xf32, #tpu.memory_space<any>>) dst(%arg6 : memref<16x32xf32, #tpu.memory_space<vmem>>)
      %c1_i32_31 = arith.constant 1 : i32
      %76 = tpu.memref_slice %arg8[%c1_i32_31] : memref<2x!tpu.dma_semaphore, #tpu.memory_space<semaphore_mem>> -> memref<1x!tpu.dma_semaphore, #tpu.memory_space<semaphore_mem>>
      %77 = tpu.memref_squeeze %76 : memref<1x!tpu.dma_semaphore, #tpu.memory_space<semaphore_mem>> -> memref<!tpu.dma_semaphore, #tpu.memory_space<semaphore_mem>>
      tpu.wait_dma2 semaphore(%77 : memref<!tpu.dma_semaphore, #tpu.memory_space<semaphore_mem>>) src(%arg4 : memref<16x32xf32, #tpu.memory_space<any>>) dst(%arg7 : memref<16x32xf32, #tpu.memory_space<vmem>>)
      %c0_32 = arith.constant 0 : index
      %c0_33 = arith.constant 0 : index
      %78 = vector.load %arg6[%c0_32, %c0_33] : memref<16x32xf32, #tpu.memory_space<vmem>>, vector<16x32xf32>
      %79 = arith.mulf %78, %78 : vector<16x32xf32>
      %cst_34 = arith.constant dense<0.000000e+00> : vector<16xf32>
      %80 = vector.multi_reduction <add>, %79, %cst_34 [1] : vector<16x32xf32> to vector<16xf32>
      %81 = vector.shape_cast %80 : vector<16xf32> to vector<16x1xf32>
      %cst_35 = arith.constant 1.000000e-24 : f32
      %82 = vector.broadcast %cst_35 : f32 to vector<16x1xf32>
      %83 = arith.maximumf %81, %82 : vector<16x1xf32>
      %84 = math.rsqrt %83 : vector<16x1xf32>
      %85 = vector.broadcast %84 : vector<16x1xf32> to vector<16x32xf32>
      %86 = arith.mulf %78, %85 : vector<16x32xf32>
      %cst_36 = arith.constant 2.000000e+00 : f32
      %87 = vector.broadcast %cst_36 : f32 to vector<16x32xf32>
      %88 = arith.mulf %86, %87 : vector<16x32xf32>
      %c0_37 = arith.constant 0 : index
      %c0_38 = arith.constant 0 : index
      %89 = vector.load %arg6[%c0_37, %c0_38] : memref<16x32xf32, #tpu.memory_space<vmem>>, vector<16x32xf32>
      tpu.vector_store %arg6[%c0_37, %c0_38], %88 {strides = array<i32>} : memref<16x32xf32, #tpu.memory_space<vmem>>, vector<16x32xf32>,
      %c0_39 = arith.constant 0 : index
      %c0_40 = arith.constant 0 : index
      %90 = vector.load %arg7[%c0_39, %c0_40] : memref<16x32xf32, #tpu.memory_space<vmem>>, vector<16x32xf32>
      %91 = arith.mulf %90, %90 : vector<16x32xf32>
      %cst_41 = arith.constant dense<0.000000e+00> : vector<16xf32>
      %92 = vector.multi_reduction <add>, %91, %cst_41 [1] : vector<16x32xf32> to vector<16xf32>
      %93 = vector.shape_cast %92 : vector<16xf32> to vector<16x1xf32>
      %cst_42 = arith.constant 1.000000e-24 : f32
      %94 = vector.broadcast %cst_42 : f32 to vector<16x1xf32>
      %95 = arith.maximumf %93, %94 : vector<16x1xf32>
      %96 = math.rsqrt %95 : vector<16x1xf32>
      %97 = vector.broadcast %96 : vector<16x1xf32> to vector<16x32xf32>
      %98 = arith.mulf %90, %97 : vector<16x32xf32>
      %cst_43 = arith.constant 1.42857146 : f32
      %99 = vector.broadcast %cst_43 : f32 to vector<16x32xf32>
      %100 = arith.mulf %98, %99 : vector<16x32xf32>
      %c0_44 = arith.constant 0 : index
      %c0_45 = arith.constant 0 : index
      %101 = vector.load %arg7[%c0_44, %c0_45] : memref<16x32xf32, #tpu.memory_space<vmem>>, vector<16x32xf32>
      tpu.vector_store %arg7[%c0_44, %c0_45], %100 {strides = array<i32>} : memref<16x32xf32, #tpu.memory_space<vmem>>, vector<16x32xf32>,
    } else {
    }
    %c0 = arith.constant 0 : index
    %c0_1 = arith.constant 0 : index
    %3 = vector.load %arg1[%c0, %c0_1] : memref<8x32xf32, #tpu.memory_space<vmem>>, vector<8x32xf32>
    %4 = arith.mulf %3, %3 : vector<8x32xf32>
    %cst = arith.constant dense<0.000000e+00> : vector<8xf32>
    %5 = vector.multi_reduction <add>, %4, %cst [1] : vector<8x32xf32> to vector<8xf32>
    %6 = vector.shape_cast %5 : vector<8xf32> to vector<8x1xf32>
    %cst_2 = arith.constant 1.000000e-24 : f32
    %7 = vector.broadcast %cst_2 : f32 to vector<8x1xf32>
    %8 = arith.maximumf %6, %7 : vector<8x1xf32>
    %9 = math.rsqrt %8 : vector<8x1xf32>
    %10 = vector.broadcast %9 : vector<8x1xf32> to vector<8x32xf32>
    %11 = arith.mulf %3, %10 : vector<8x32xf32>
    %c0_3 = arith.constant 0 : index
    %c0_4 = arith.constant 0 : index
    %12 = vector.load %arg3[%c0_3, %c0_4] : memref<8x32xf32, #tpu.memory_space<vmem>>, vector<8x32xf32>
    %13 = arith.mulf %12, %12 : vector<8x32xf32>
    %cst_5 = arith.constant dense<0.000000e+00> : vector<8xf32>
    %14 = vector.multi_reduction <add>, %13, %cst_5 [1] : vector<8x32xf32> to vector<8xf32>
    %15 = vector.shape_cast %14 : vector<8xf32> to vector<8x1xf32>
    %cst_6 = arith.constant 1.000000e-24 : f32
    %16 = vector.broadcast %cst_6 : f32 to vector<8x1xf32>
    %17 = arith.maximumf %15, %16 : vector<8x1xf32>
    %18 = math.rsqrt %17 : vector<8x1xf32>
    %19 = vector.broadcast %18 : vector<8x1xf32> to vector<8x32xf32>
    %20 = arith.mulf %12, %19 : vector<8x32xf32>
    %c0_7 = arith.constant 0 : index
    %c0_8 = arith.constant 0 : index
    %21 = vector.load %arg6[%c0_7, %c0_8] : memref<16x32xf32, #tpu.memory_space<vmem>>, vector<16x32xf32>
    %cst_9 = arith.constant dense<0.000000e+00> : vector<8x16xf32>
    %22 = tpu.matmul %11, %21, %cst_9 {dimension_numbers = #tpu.dot_dimension_numbers<[1], [1], [0], [0], [0, 0, 1, 0], [], []>} : vector<8x32xf32>, vector<16x32xf32>, vector<8x16xf32> -> vector<8x16xf32>
    %c0_10 = arith.constant 0 : index
    %c0_11 = arith.constant 0 : index
    %23 = vector.load %arg7[%c0_10, %c0_11] : memref<16x32xf32, #tpu.memory_space<vmem>>, vector<16x32xf32>
    %cst_12 = arith.constant dense<0.000000e+00> : vector<8x16xf32>
    %24 = tpu.matmul %20, %23, %cst_12 {dimension_numbers = #tpu.dot_dimension_numbers<[1], [1], [0], [0], [0, 0, 1, 0], [], []>} : vector<8x32xf32>, vector<16x32xf32>, vector<8x16xf32> -> vector<8x16xf32>
    %cst_13 = arith.constant dense<0xFF800000> : vector<8xf32>
    %25 = vector.multi_reduction <maximumf>, %22, %cst_13 [1] : vector<8x16xf32> to vector<8xf32>
    %26 = vector.shape_cast %25 : vector<8xf32> to vector<8x1xf32>
    %27 = vector.broadcast %26 : vector<8x1xf32> to vector<8x16xf32>
    %28 = arith.subf %22, %27 : vector<8x16xf32>
    %29 = math.exp %28 : vector<8x16xf32>
    %cst_14 = arith.constant dense<0.000000e+00> : vector<8xf32>
    %30 = vector.multi_reduction <add>, %29, %cst_14 [1] : vector<8x16xf32> to vector<8xf32>
    %31 = vector.shape_cast %30 : vector<8xf32> to vector<8x1xf32>
    %32 = math.log %31 : vector<8x1xf32>
    %33 = vector.broadcast %32 : vector<8x1xf32> to vector<8x16xf32>
    %34 = arith.subf %28, %33 : vector<8x16xf32>
    %cst_15 = arith.constant dense<0xFF800000> : vector<8xf32>
    %35 = vector.multi_reduction <maximumf>, %24, %cst_15 [1] : vector<8x16xf32> to vector<8xf32>
    %36 = vector.shape_cast %35 : vector<8xf32> to vector<8x1xf32>
    %37 = vector.broadcast %36 : vector<8x1xf32> to vector<8x16xf32>
    %38 = arith.subf %24, %37 : vector<8x16xf32>
    %39 = math.exp %38 : vector<8x16xf32>
    %cst_16 = arith.constant dense<0.000000e+00> : vector<8xf32>
    %40 = vector.multi_reduction <add>, %39, %cst_16 [1] : vector<8x16xf32> to vector<8xf32>
    %41 = vector.shape_cast %40 : vector<8xf32> to vector<8x1xf32>
    %42 = math.log %41 : vector<8x1xf32>
    %43 = vector.broadcast %42 : vector<8x1xf32> to vector<8x16xf32>
    %44 = arith.subf %38, %43 : vector<8x16xf32>
    %45 = arith.subf %44, %34 : vector<8x16xf32>
    %46 = arith.mulf %39, %45 : vector<8x16xf32>
    %cst_17 = arith.constant dense<0.000000e+00> : vector<8xf32>
    %47 = vector.multi_reduction <add>, %46, %cst_17 [1] : vector<8x16xf32> to vector<8xf32>
    %48 = vector.shape_cast %47 : vector<8xf32> to vector<8x1xf32>
    %49 = tpu.reciprocal %41 : vector<8x1xf32> -> vector<8x1xf32>
    %50 = arith.mulf %48, %49 : vector<8x1xf32>
    %c8_i32 = arith.constant 8 : i32
    %51 = arith.muli %arg0, %c8_i32 : i32
    %52 = tpu.iota {dimensions = array<i32: 0>} : vector<8x1xi32>
    %53 = vector.broadcast %51 : i32 to vector<8x1xi32>
    %54 = arith.addi %53, %52 : vector<8x1xi32>
    %c13_i32 = arith.constant 13 : i32
    %55 = vector.broadcast %c13_i32 : i32 to vector<8x1xi32>
    %56 = arith.cmpi slt, %54, %55 : vector<8x1xi32>
    %cst_18 = arith.constant 0.000000e+00 : f32
    %57 = vector.broadcast %cst_18 : f32 to vector<8x1xf32>
    %58 = arith.select %56, %50, %57 : vector<8x1xi1>, vector<8x1xf32>
    %c0_19 = arith.constant 0 : index
    %c0_20 = arith.constant 0 : index
    %59 = memref.load %arg5[%c0_19, %c0_20] : memref<1x1xf32, #tpu.memory_space<smem>>
    %60 = vector.shape_cast %58 : vector<8x1xf32> to vector<1x8x1xf32>
    %cst_21 = arith.constant dense<0.000000e+00> : vector<1xf32>
    %61 = vector.multi_reduction <add>, %60, %cst_21 [1, 2] : vector<1x8x1xf32> to vector<1xf32>
    %62 = vector.shape_cast %61 : vector<1xf32> to vector<1x1x1xf32>
    %63 = vector.extract %62[0, 0, 0] : f32 from vector<1x1x1xf32>
    %64 = arith.addf %59, %63 : f32
    %c0_22 = arith.constant 0 : index
    %c0_23 = arith.constant 0 : index
    %65 = memref.load %arg5[%c0_22, %c0_23] : memref<1x1xf32, #tpu.memory_space<smem>>
    memref.store %64, %arg5[%c0_22, %c0_23] : memref<1x1xf32, #tpu.memory_space<smem>>
    %c1_i32 = arith.constant 1 : i32
    %66 = arith.cmpi eq, %arg0, %c1_i32 : i32
    %67 = arith.extui %66 : i1 to i32
    %c0_i32_24 = arith.constant 0 : i32
    %68 = arith.cmpi ne, %67, %c0_i32_24 : i32
    scf.if %68 {
      %c0_25 = arith.constant 0 : index
      %c0_26 = arith.constant 0 : index
      %69 = memref.load %arg5[%c0_25, %c0_26] : memref<1x1xf32, #tpu.memory_space<smem>>
      %cst_27 = arith.constant 0.0769230798 : f32
      %70 = arith.mulf %69, %cst_27 : f32
      %c0_28 = arith.constant 0 : index
      %c0_29 = arith.constant 0 : index
      %71 = memref.load %arg5[%c0_28, %c0_29] : memref<1x1xf32, #tpu.memory_space<smem>>
      memref.store %70, %arg5[%c0_28, %c0_29] : memref<1x1xf32, #tpu.memory_space<smem>>
    } else {
    }
    return
  }
  func.func @transform_0(%arg0: i32) -> (i32, i32) {
    %c0_i32 = arith.constant 0 : i32
    %c0_i32_0 = arith.constant 0 : i32
    return %arg0, %c0_i32 : i32, i32
  }
  func.func @transform_2(%arg0: i32) -> (i32, i32) {
    %c0_i32 = arith.constant 0 : i32
    %c0_i32_0 = arith.constant 0 : i32
    return %arg0, %c0_i32 : i32, i32
  }
  func.func @transform_4(%arg0: i32) -> (i32, i32) {
    %c0_i32 = arith.constant 0 : i32
    %c0_i32_0 = arith.constant 0 : i32
    %c0_i32_1 = arith.constant 0 : i32
    return %c0_i32, %c0_i32_0 : i32, i32
  }
}

</mosaic_0001>

<llo_original>
// kernel: tpu_custom_call.1
$region0: #{tpu_custom_call.1}
  #allocation0 [shape = 'u32[]', space=smem, size = 0x4, offset = 0x4, fixed_abs, tag = 'smem constant byte address 0x4 - core index']
  #allocation1 [shape = 'u32[72,128]{1,0:T(1,128)}', space=vmem, size = 0x9000, scoped, tag = 'internal scratch']
  #allocation2 [shape = 'f32[16,32]{1,0:T(8,128)}', space=vmem, size = 0x2000, scoped, tag = 'scratch operand']
  #allocation3 [shape = 'f32[16,32]{1,0:T(8,128)}', space=vmem, size = 0x2000, scoped, tag = 'scratch operand']
  #allocation4 [shape = 's32[2]{0}', space=sflag, size = 0x8, scoped, tag = 'scratch operand']
  #allocation11 [shape = 's32[]', space=sflag, size = 0x4, offset = 0, fixed_abs, tag = 'sflag constant byte address 0x0 - dummy sync flag']
  #allocation12 [shape = 's32[]', space=sflag, size = 0x4, offset = 0, fixed_abs, tag = 'sflag constant byte address 0x0 - dummy sync flag']
  #allocation13 [shape = 'u32[]', space=smem, size = 0x4, offset = 0x44, fixed_abs, tag = 'smem constant byte address 0x44 - assertion arg 0']
  #allocation14 [shape = 'u32[]', space=smem, size = 0x4, offset = 0x48, fixed_abs, tag = 'smem constant byte address 0x48 - assertion arg 1']
  #allocation15 [shape = 's32[]', space=sflag, size = 0x4, offset = 0, fixed_abs, tag = 'sflag constant byte address 0x0 - dummy sync flag']
  #allocation16 [shape = 's32[]', space=sflag, size = 0x4, offset = 0, fixed_abs, tag = 'sflag constant byte address 0x0 - dummy sync flag']
  %s0 = inlined_call_operand.hbm [shape: f32[16,32], index: 0, kind: input, shape index: {}]
  %s1 = inlined_call_operand.hbm [shape: f32[16,32], index: 1, kind: input, shape index: {}]
  %s2 = inlined_call_operand.hbm [shape: f32[16,32], index: 2, kind: input, shape index: {}]
  %s3 = inlined_call_operand.hbm [shape: f32[16,32], index: 3, kind: input, shape index: {}]
  %s4 = inlined_call_operand.hbm [shape: f32[1,1], index: 4, kind: output, shape index: {}]
  %s5 = sld [smem:[#allocation0]]
  $region65: #{tpu_custom_call.1} parent=0
    _
  %s7 = ssub.s32 1, %s5
  %s8 = scalar_select 0, %s7, %s5
  $region1: #{tpu_custom_call.1} parent=0
    #allocation5 [shape = 'u8[8192]{0}', space=vmem, size = 0x2000, scoped, tag = 'input window, operand 0']
    #allocation6 [shape = 's32[2]{0}', space=sflag, size = 0x8, scoped, tag = 'scoped memory for tpu_custom_call.1']
    #allocation7 [shape = 's32[2]{0}', space=sflag, size = 0x8, scoped, tag = 'scoped memory for tpu_custom_call.1']
    #allocation8 [shape = 'u8[8192]{0}', space=vmem, size = 0x2000, scoped, tag = 'input window, operand 2']
    #allocation9 [shape = 's32[2]{0}', space=sflag, size = 0x8, scoped, tag = 'scoped memory for tpu_custom_call.1']
    #allocation10 [shape = 'u8[512]{0}', space=smem, size = 0x200, scoped, tag = 'output window, operand 0, single buffered']
    %9 = vsyncpa [#allocation6], 0
    %s10 = scalar_lea.sflag [#allocation6], 1
    %11 = vsyncpa %s10, 0
    %12 = vsyncpa [#allocation9], 0
    %s13 = scalar_lea.sflag [#allocation9], 1
    %14 = vsyncpa %s13, 0
    %15 = vsyncpa [#allocation7], 0
    loop: start=0, step=1, limit=4
    $region2: #{tpu_custom_call.1} parent=1 // loop_pre_header
      _
    $region3: #{tpu_custom_call.1} parent=1 // loop_header
      %s17 = sphi 0, %s21
      %p18 = scmp.ge.s32.totalorder %s17, 4
      %s27 = sphi 0, %s29
      %s30 = sphi 0, %s27
      %s31 = sphi 0, %s30
      %s47 = sphi 0, %s31
      %s53 = sphi 0, %s55
      %s56 = sphi 0, %s53
      %s57 = sphi 0, %s56
      %s73 = sphi 0, %s57
      %s77 = sphi 0, %s77
      %s79 = sphi 0, %s77
      %s80 = sphi 0, %s79
      %s94 = sphi 0, %s80
    $region4: #{tpu_custom_call.1} parent=1 // loop_header_branch
      %20 = sbr.rel (%p18) target = $region8
    $region5: #{tpu_custom_call.1} parent=1 // loop_body
      %s22 = ssub.s32 %s17, 1
      %s23 = ssub.s32 %s17, 2
      %s24 = sadd.s32 %s17, 1
      %s25 = ssub.s32 %s17, %s24
      %p26 = scmp.eq.s32.totalorder %s25, 0
      %s28 = sadd.s32 %s27, 1
      %s29 = scalar_select %p26, %s27, %s28
      %p32 = pneg %p26
      %p33 = scmp.eq.s32.totalorder %s17, 1
      %p34 = por %p32, %p33
      %p35 = scmp.ne.s32.totalorder %s27, %s30
      %p36 = scmp.eq.s32.totalorder %s17, 0
      %p37 = por %p35, %p36
      %p38 = scmp.ne.s32.totalorder %s27, %s30
      %p39 = scmp.eq.s32.totalorder %s22, 1
      %p40 = por %p38, %p39
      %p41 = scmp.ne.s32.totalorder %s30, %s31
      %p42 = scmp.eq.s32.totalorder %s22, 0
      %p43 = por %p41, %p42
      %p44 = scmp.ne.s32.totalorder %s30, %s31
      %p45 = scmp.eq.s32.totalorder %s23, 1
      %p46 = por %p44, %p45
      %p48 = scmp.ne.s32.totalorder %s31, %s47
      %p49 = scmp.eq.s32.totalorder %s23, 0
      %p50 = por %p48, %p49
      %s51 = ssub.s32 %s17, %s24
      %p52 = scmp.eq.s32.totalorder %s51, 0
      %s54 = sadd.s32 %s53, 1
      %s55 = scalar_select %p52, %s53, %s54
      %p58 = pneg %p52
      %p59 = scmp.eq.s32.totalorder %s17, 1
      %p60 = por %p58, %p59
      %p61 = scmp.ne.s32.totalorder %s53, %s56
      %p62 = scmp.eq.s32.totalorder %s17, 0
      %p63 = por %p61, %p62
      %p64 = scmp.ne.s32.totalorder %s53, %s56
      %p65 = scmp.eq.s32.totalorder %s22, 1
      %p66 = por %p64, %p65
      %p67 = scmp.ne.s32.totalorder %s56, %s57
      %p68 = scmp.eq.s32.totalorder %s22, 0
      %p69 = por %p67, %p68
      %p70 = scmp.ne.s32.totalorder %s56, %s57
      %p71 = scmp.eq.s32.totalorder %s23, 1
      %p72 = por %p70, %p71
      %p74 = scmp.ne.s32.totalorder %s57, %s73
      %p75 = scmp.eq.s32.totalorder %s23, 0
      %p76 = por %p74, %p75
      %s78 = sadd.s32 %s77, 1
      %p81 = scmp.eq.s32.totalorder %s17, 1
      %p82 = scmp.ne.s32.totalorder %s77, %s79
      %p83 = scmp.eq.s32.totalorder %s17, 0
      %p84 = por %p82, %p83
      %p85 = scmp.ne.s32.totalorder %s77, %s79
      %p86 = scmp.eq.s32.totalorder %s22, 1
      %p87 = por %p85, %p86
      %p88 = scmp.ne.s32.totalorder %s79, %s80
      %p89 = scmp.eq.s32.totalorder %s22, 0
      %p90 = por %p88, %p89
      %p91 = scmp.ne.s32.totalorder %s79, %s80
      %p92 = scmp.eq.s32.totalorder %s23, 1
      %p93 = por %p91, %p92
      %p95 = scmp.ne.s32.totalorder %s80, %s94
      %p96 = scmp.eq.s32.totalorder %s23, 0
      %p97 = por %p95, %p96
      %p98 = scmp.le.s32.totalorder 1, %s17
      %p99 = scmp.lt.s32.totalorder %s17, 3
      %p100 = pnand %p98, %p99
      %p101 = pneg %p100
      // Predicated region
      $region9: #{tpu_custom_call.1} parent=5 // pred_check
        _
      $region10: #{tpu_custom_call.1} parent=5 // pred_check_branch
        %103 = sbr.rel (%p100) target = $region12
      $region11: #{tpu_custom_call.1} parent=5 // pred_region
        %s104 = ssub.s32 %s17, 1
      $region12: #{tpu_custom_call.1} parent=5 // pred_fallthru
        _
      %p105 = scmp.lt.s32.totalorder %s17, 2
      // Predicated region
      $region13: #{tpu_custom_call.1} parent=5 // pred_check
        %p106 = pneg %p105
      $region14: #{tpu_custom_call.1} parent=5 // pred_check_branch
        %108 = sbr.rel (%p106) target = $region16
      $region15: #{tpu_custom_call.1} parent=5 // pred_region
        // Predicated region
        $region17: #{tpu_custom_call.1} parent=15 // pred_check
          %p109 = pneg %p37
        $region18: #{tpu_custom_call.1} parent=15 // pred_check_branch
          %111 = sbr.rel (%p109) target = $region20
        $region19: #{tpu_custom_call.1} parent=15 // pred_region
          %s112 = sand.u32 %s27, 1
          %s113 = scalar_lea.sflag [#allocation6], %s112
          %s114 = sand.u32 %s27, 1
          %s115 = smul.addr %s114, 8
          %s116 = scalar_lea.vmem [#allocation5], %s115
          %118 = vsyncadd %s113, 0
          %s119 = smul.addr %s17, 8
          %s120 = scalar_lea.hbm %s0, %s119
          %s122 = sshll.u32 %s120, 4
          %s123 = int_to_ptr.hbm [resolvable:$true] %s122
          %s124 = sshll.u32 %s116, 4
          %s125 = int_to_ptr.vmem [resolvable:$true] %s124
          %127 = dma.hbm_to_vmem [thread:$0]  %s123, 128, %s125, %s113
        $region20: #{tpu_custom_call.1} parent=15 // pred_fallthru
          _
        // Predicated region
        $region21: #{tpu_custom_call.1} parent=15 // pred_check
          %p128 = pneg %p63
        $region22: #{tpu_custom_call.1} parent=15 // pred_check_branch
          %130 = sbr.rel (%p128) target = $region24
        $region23: #{tpu_custom_call.1} parent=15 // pred_region
          %s131 = sand.u32 %s53, 1
          %s132 = scalar_lea.sflag [#allocation9], %s131
          %s133 = sand.u32 %s53, 1
          %s134 = smul.addr %s133, 8
          %s135 = scalar_lea.vmem [#allocation8], %s134
          %137 = vsyncadd %s132, 0
          %s138 = smul.addr %s17, 8
          %s139 = scalar_lea.hbm %s2, %s138
          %s141 = sshll.u32 %s139, 4
          %s142 = int_to_ptr.hbm [resolvable:$true] %s141
          %s143 = sshll.u32 %s135, 4
          %s144 = int_to_ptr.vmem [resolvable:$true] %s143
          %146 = dma.hbm_to_vmem [thread:$0]  %s142, 128, %s144, %s132
        $region24: #{tpu_custom_call.1} parent=15 // pred_fallthru
          _
      $region16: #{tpu_custom_call.1} parent=5 // pred_fallthru
        _
      %p147 = scmp.le.s32.totalorder 1, %s17
      %p148 = scmp.lt.s32.totalorder %s17, 3
      %p149 = pnand %p147, %p148
      %p150 = pneg %p149
      // Predicated region
      $region25: #{tpu_custom_call.1} parent=5 // pred_check
        _
      $region26: #{tpu_custom_call.1} parent=5 // pred_check_branch
        %152 = sbr.rel (%p149) target = $region28
      $region27: #{tpu_custom_call.1} parent=5 // pred_region
        %s153 = ssub.s32 %s17, 1
        %s154 = sand.u32 %s30, 1
        %s155 = scalar_lea.sflag [#allocation6], %s154
        %s156 = sand.u32 %s30, 1
        %s157 = smul.addr %s156, 8
        %s158 = scalar_lea.vmem [#allocation5], %s157
        // Predicated region
        $region29: #{tpu_custom_call.1} parent=27 // pred_check
          %p159 = pneg %p43
        $region30: #{tpu_custom_call.1} parent=27 // pred_check_branch
          %161 = sbr.rel (%p159) target = $region32
        $region31: #{tpu_custom_call.1} parent=27 // pred_region
          %163 = dma.done %s155, 128
        $region32: #{tpu_custom_call.1} parent=27 // pred_fallthru
          _
        %s164 = sand.u32 %s56, 1
        %s165 = scalar_lea.sflag [#allocation9], %s164
        %s166 = sand.u32 %s56, 1
        %s167 = smul.addr %s166, 8
        %s168 = scalar_lea.vmem [#allocation8], %s167
        // Predicated region
        $region33: #{tpu_custom_call.1} parent=27 // pred_check
          %p169 = pneg %p69
        $region34: #{tpu_custom_call.1} parent=27 // pred_check_branch
          %171 = sbr.rel (%p169) target = $region36
        $region35: #{tpu_custom_call.1} parent=27 // pred_region
          %173 = dma.done %s165, 128
        $region36: #{tpu_custom_call.1} parent=27 // pred_fallthru
          _
        %s174 = sand.u32 %s30, 1
        %s175 = scalar_lea.sflag [#allocation6], %s174
        %s176 = sand.u32 %s30, 1
        %s177 = smul.addr %s176, 8
        %s178 = scalar_lea.vmem [#allocation5], %s177
        %p179 = pneg %p43
        %p180 = pneg %p40
        %s181 = sand.u32 %s56, 1
        %s182 = scalar_lea.sflag [#allocation9], %s181
        %s183 = sand.u32 %s56, 1
        %s184 = smul.addr %s183, 8
        %s185 = scalar_lea.vmem [#allocation8], %s184
        %p186 = pneg %p69
        %p187 = pneg %p66
        %p188 = pneg %p90
        %p189 = pneg %p87
        %p190 = scmp.eq.s32.totalorder %s22, 0
        // Predicated region
        $region37: #{tpu_custom_call.1} parent=27 // pred_check
          %p191 = pneg %p190
        $region38: #{tpu_custom_call.1} parent=27 // pred_check_branch
          %193 = sbr.rel (%p191) target = $region40
        $region39: #{tpu_custom_call.1} parent=27 // pred_region
          // Predicated region
          $region41: #{tpu_custom_call.1} parent=39 // pred_check
            _
          $region42: #{tpu_custom_call.1} parent=39 // pred_check_branch
            %195 = sbr.rel target = $region44
          $region43: #{tpu_custom_call.1} parent=39 // pred_region
            %196 = sst [smem:[#allocation13]] [#allocation12]
            %197 = sst [smem:[#allocation14]] [#allocation11]
          $region44: #{tpu_custom_call.1} parent=39 // pred_fallthru
            _
          %199 = shalt.err (0)
          %s201 = sshll.u32 %s1, 4
          %s202 = int_to_ptr.hbm [resolvable:$true] %s201
          %s203 = sshll.u32 [#allocation2], 4
          %s204 = int_to_ptr.vmem [resolvable:$true] %s203
          %206 = dma.hbm_to_vmem [thread:$0]  %s202, 256, %s204, [#allocation4]
          %s207 = scalar_lea.sflag [#allocation4], 1
          // Predicated region
          $region45: #{tpu_custom_call.1} parent=39 // pred_check
            _
          $region46: #{tpu_custom_call.1} parent=39 // pred_check_branch
            %209 = sbr.rel target = $region48
          $region47: #{tpu_custom_call.1} parent=39 // pred_region
            %210 = sst [smem:[#allocation13]] [#allocation16]
            %211 = sst [smem:[#allocation14]] [#allocation15]
          $region48: #{tpu_custom_call.1} parent=39 // pred_fallthru
            _
          %213 = shalt.err (0)
          %s215 = sshll.u32 %s3, 4
          %s216 = int_to_ptr.hbm [resolvable:$true] %s215
          %s217 = sshll.u32 [#allocation3], 4
          %s218 = int_to_ptr.vmem [resolvable:$true] %s217
          %220 = dma.hbm_to_vmem [thread:$0]  %s216, 256, %s218, %s207
          %s221 = scalar_lea.smem [#allocation10], 0
          %222 = sst [smem:[%s221]] 0.0
          %s223 = smul.u32 16, 1
          %s224 = sshll.u32 %s223, 4
          %225 = dma.done [#allocation4], %s224
          %s226 = sshll.u32 %s223, 4
          %227 = dma.done %s207, %s226
          %v228 = vld [vmem:[#allocation2] sm:$0xff]
          %v229 = vld [vmem:[#allocation2 + $0x8] sm:$0xff]
          %v230 = vmul.f32 %v228, %v228
          %v231 = vmul.f32 %v229, %v229
          %vm232 = vcmask 261120
          %v233 = vsel %vm232, %v230, 0.0
          %234 = vadd.xlane.f32.xlu0 %v233
          %v235 = vpop.xlane.xlu0 %234
          %v236 = vsel %vm232, %v231, 0.0
          %237 = vadd.xlane.f32.xlu0 %v236
          %v238 = vpop.xlane.xlu0 %237
          %v239 = vmax.f32 %v235, 1e-24
          %v240 = vmax.f32 %v238, 1e-24
          %v241 = vrsqrt.pop %v239
          %v242 = vmul.f32 %v241, %v239
          %v243 = vmul.f32 %v242, %v241
          %v244 = vmul.f32 0.5, %v243
          %v245 = vsub.f32 1.5, %v244
          %v246 = vmul.f32 %v241, %v245
          %vm247 = vweird.f32 %v239
          %vm248 = vweird.f32 %v241
          %vm249 = vmor %vm247, %vm248
          %v250 = vsel %vm249, %v241, %v246
          %v251 = vrsqrt.pop %v240
          %v252 = vmul.f32 %v251, %v240
          %v253 = vmul.f32 %v252, %v251
          %v254 = vmul.f32 0.5, %v253
          %v255 = vsub.f32 1.5, %v254
          %v256 = vmul.f32 %v251, %v255
          %vm257 = vweird.f32 %v240
          %vm258 = vweird.f32 %v251
          %vm259 = vmor %vm257, %vm258
          %v260 = vsel %vm259, %v251, %v256
          %v261 = vmul.f32 %v228, %v250
          %v262 = vmul.f32 %v229, %v260
          %v263 = vmul.f32 %v261, 2.0
          %v264 = vmul.f32 %v262, 2.0
          %265 = vst.msk [vmem:[#allocation2] sm:$0xff] %vm232, %v263
          %266 = vst.msk [vmem:[#allocation2 + $0x8] sm:$0xff] %vm232, %v264
          %v267 = vld [vmem:[#allocation3] sm:$0xff]
          %v268 = vld [vmem:[#allocation3 + $0x8] sm:$0xff]
          %v269 = vmul.f32 %v267, %v267
          %v270 = vmul.f32 %v268, %v268
          %v271 = vsel %vm232, %v269, 0.0
          %272 = vadd.xlane.f32.xlu0 %v271
          %v273 = vpop.xlane.xlu0 %272
          %v274 = vsel %vm232, %v270, 0.0
          %275 = vadd.xlane.f32.xlu0 %v274
          %v276 = vpop.xlane.xlu0 %275
          %v277 = vmax.f32 %v273, 1e-24
          %v278 = vmax.f32 %v276, 1e-24
          %v279 = vrsqrt.pop %v277
          %v280 = vmul.f32 %v279, %v277
          %v281 = vmul.f32 %v280, %v279
          %v282 = vmul.f32 0.5, %v281
          %v283 = vsub.f32 1.5, %v282
          %v284 = vmul.f32 %v279, %v283
          %vm285 = vweird.f32 %v277
          %vm286 = vweird.f32 %v279
          %vm287 = vmor %vm285, %vm286
          %v288 = vsel %vm287, %v279, %v284
          %v289 = vrsqrt.pop %v278
          %v290 = vmul.f32 %v289, %v278
          %v291 = vmul.f32 %v290, %v289
          %v292 = vmul.f32 0.5, %v291
          %v293 = vsub.f32 1.5, %v292
          %v294 = vmul.f32 %v289, %v293
          %vm295 = vweird.f32 %v278
          %vm296 = vweird.f32 %v289
          %vm297 = vmor %vm295, %vm296
          %v298 = vsel %vm297, %v289, %v294
          %v299 = vmul.f32 %v267, %v288
          %v300 = vmul.f32 %v268, %v298
          %v301 = vmul.f32 %v299, 1.4285715
          %v302 = vmul.f32 %v300, 1.4285715
          %303 = vst.msk [vmem:[#allocation3] sm:$0xff] %vm232, %v301
          %304 = vst.msk [vmem:[#allocation3 + $0x8] sm:$0xff] %vm232, %v302
        $region40: #{tpu_custom_call.1} parent=27 // pred_fallthru
          _
        %v305 = vld [vmem:[%s158] sm:$0xff]
        %v306 = vmul.f32 %v305, %v305
        %vm307 = vcmask 261120
        %v308 = vsel %vm307, %v306, 0.0
        %309 = vadd.xlane.f32.xlu0 %v308
        %v310 = vpop.xlane.xlu0 %309
        %v311 = vmax.f32 %v310, 1e-24
        %v312 = vrsqrt.pop %v311
        %v313 = vmul.f32 %v312, %v311
        %v314 = vmul.f32 %v313, %v312
        %v315 = vmul.f32 0.5, %v314
        %v316 = vsub.f32 1.5, %v315
        %v317 = vmul.f32 %v312, %v316
        %vm318 = vweird.f32 %v311
        %vm319 = vweird.f32 %v312
        %vm320 = vmor %vm318, %vm319
        %v321 = vsel %vm320, %v312, %v317
        %v322 = vmul.f32 %v305, %v321
        %v323 = vld [vmem:[%s168] sm:$0xff]
        %v324 = vmul.f32 %v323, %v323
        %v325 = vsel %vm307, %v324, 0.0
        %326 = vadd.xlane.f32.xlu0 %v325
        %v327 = vpop.xlane.xlu0 %326
        %v328 = vmax.f32 %v327, 1e-24
        %v329 = vrsqrt.pop %v328
        %v330 = vmul.f32 %v329, %v328
        %v331 = vmul.f32 %v330, %v329
        %v332 = vmul.f32 0.5, %v331
        %v333 = vsub.f32 1.5, %v332
        %v334 = vmul.f32 %v329, %v333
        %vm335 = vweird.f32 %v328
        %vm336 = vweird.f32 %v329
        %vm337 = vmor %vm335, %vm336
        %v338 = vsel %vm337, %v329, %v334
        %v339 = vmul.f32 %v323, %v338
        %v340 = vld [vmem:[#allocation2] sm:$0xff]
        %v341 = vld [vmem:[#allocation2 + $0x8] sm:$0xff]
        %v343 = vsel %vm307, %v322, 0
        %v346 = vsel %vm307, %v340, 0
        %v349 = vsel %vm307, %v341, 0
        %351 = vmatpush.xpose.msra.mxu0 0.0
        %352 = vmatpush.xpose.msra.mxu0 0.0
        %353 = vmatpush.xpose.msra.mxu0 0.0
        %354 = vmatpush.xpose.msra.mxu0 0.0
        %355 = vmatpush.xpose.msra.mxu0 0.0
        %356 = vmatpush.xpose.msra.mxu0 0.0
        %357 = vmatpush.xpose.msra.mxu0 0.0
        %358 = vmatpush.xpose.msra.mxu0 0.0
        %359 = vmatpush.xpose.msra.mxu0 0.0
        %360 = vmatpush.xpose.msra.mxu0 0.0
        %361 = vmatpush.xpose.msra.mxu0 0.0
        %362 = vmatpush.xpose.msra.mxu0 0.0
        %363 = vmatpush.xpose.msra.mxu0 0.0
        %364 = vmatpush.xpose.msra.mxu0 0.0
        %365 = vmatpush.xpose.msra.mxu0 %v349
        %366 = vmatpush.xpose.msra.mxu0 %v346
        %367 = vmatmul.f32.gmra.mxu0 %v343
        %v368 = vpop.f32.mrf.mxu0
        %v369 = vadd.f32 0.0, %v368
        %370 = vdwg.mxu0
        %v371 = vld [vmem:[#allocation3] sm:$0xff]
        %v372 = vld [vmem:[#allocation3 + $0x8] sm:$0xff]
        %v374 = vsel %vm307, %v339, 0
        %v377 = vsel %vm307, %v371, 0
        %v380 = vsel %vm307, %v372, 0
        %382 = vmatpush.xpose.msra.mxu0 0.0
        %383 = vmatpush.xpose.msra.mxu0 0.0
        %384 = vmatpush.xpose.msra.mxu0 0.0
        %385 = vmatpush.xpose.msra.mxu0 0.0
        %386 = vmatpush.xpose.msra.mxu0 0.0
        %387 = vmatpush.xpose.msra.mxu0 0.0
        %388 = vmatpush.xpose.msra.mxu0 0.0
        %389 = vmatpush.xpose.msra.mxu0 0.0
        %390 = vmatpush.xpose.msra.mxu0 0.0
        %391 = vmatpush.xpose.msra.mxu0 0.0
        %392 = vmatpush.xpose.msra.mxu0 0.0
        %393 = vmatpush.xpose.msra.mxu0 0.0
        %394 = vmatpush.xpose.msra.mxu0 0.0
        %395 = vmatpush.xpose.msra.mxu0 0.0
        %396 = vmatpush.xpose.msra.mxu0 %v380
        %397 = vmatpush.xpose.msra.mxu0 %v377
        %398 = vmatmul.f32.gmra.mxu0 %v374
        %v399 = vpop.f32.mrf.mxu0
        %v400 = vadd.f32 0.0, %v399
        %401 = vdwg.mxu0
        %vm402 = vcmask 130048
        %v403 = vsel %vm402, %v369, -inf
        %404 = vmax.xlane.f32.xlu0 %v403
        %v405 = vpop.xlane.xlu0 %404
        %v406 = vsub.f32 %v369, %v405
        %v407 = vmul.f32 %v406, 1.442695
        %v408 = vpow.pop %v407
        %v409 = vsel %vm402, %v408, 0.0
        %410 = vadd.xlane.f32.xlu0 %v409
        %v411 = vpop.xlane.xlu0 %410
        %v412 = vlog2.pop %v411
        %v413 = vmul.f32 %v412, 0.6931472
        %v414 = vsub.f32 %v406, %v413
        %v415 = vsel %vm402, %v400, -inf
        %416 = vmax.xlane.f32.xlu0 %v415
        %v417 = vpop.xlane.xlu0 %416
        %v418 = vsub.f32 %v400, %v417
        %v419 = vmul.f32 %v418, 1.442695
        %v420 = vpow.pop %v419
        %v421 = vsel %vm402, %v420, 0.0
        %422 = vadd.xlane.f32.xlu0 %v421
        %v423 = vpop.xlane.xlu0 %422
        %v424 = vlog2.pop %v423
        %v425 = vmul.f32 %v424, 0.6931472
        %v426 = vsub.f32 %v418, %v425
        %v427 = vsub.f32 %v426, %v414
        %v428 = vmul.f32 %v420, %v427
        %v429 = vsel %vm402, %v428, 0.0
        %430 = vadd.xlane.f32.xlu0 %v429
        %v431 = vpop.xlane.xlu0 %430
        %v432 = vrcp.pop %v423
        %v433 = vmul.f32 %v423, %v432
        %v434 = vsub.f32 1.0, %v433
        %v435 = vmul.f32 %v432, %v434
        %v436 = vadd.f32 %v432, %v435
        %vm437 = vweird.f32 %v423
        %vm438 = vweird.f32 %v432
        %vm439 = vmor %vm437, %vm438
        %v440 = vsel %vm439, %v432, %v436
        %v441 = vand.u32 2147483647, %v423
        %vm442 = vcmp.eq.f32.partialorder %v441, 8.507059e+37
        %v443 = vand.u32 %v423, 2147483648
        %v444 = vor.u32 1.1754944e-38, %v443
        %v445 = vsel %vm442, %v444, %v440
        %v446 = vmul.f32 %v431, %v445
        %s447 = smul.u32 %s22, 8
        %v448 = vlaneseq
        %v449 = vshrl.u32 %v448, 7
        %v450 = vstv %s447
        %v451 = vadd.s32 %v450, %v449
        %vm452 = vcmp.lt.s32.totalorder %v451, 13
        %v453 = vsel %vm452, %v446, 0.0
        %s454 = sld [smem:[#allocation10]]
        %vm455 = vcmask 7168
        %v456 = vsel %vm455, %v453, 0.0
        %457 = vadd.xlane.f32.xlu0 %v456
        %v458 = vpop.xlane.xlu0 %457
        %v459 = vrot.slane %v458, 4
        %v460 = vadd.f32 %v458, %v459
        %v461 = vrot.slane %v460, 2
        %v462 = vadd.f32 %v460, %v461
        %v463 = vrot.slane %v462, 1
        %v464 = vadd.f32 %v462, %v463
        %s465 = vtos %v464
        %s466 = sadd.f32 %s454, %s465
        %s467 = scalar_lea.smem [#allocation10], 0
        %468 = sst [smem:[%s467]] %s466
        %p469 = scmp.eq.s32.totalorder %s22, 1
        // Predicated region
        $region49: #{tpu_custom_call.1} parent=27 // pred_check
          %p470 = pneg %p469
        $region50: #{tpu_custom_call.1} parent=27 // pred_check_branch
          %472 = sbr.rel (%p470) target = $region52
        $region51: #{tpu_custom_call.1} parent=27 // pred_region
          %s473 = sld [smem:[#allocation10]]
          %s474 = smul.f32 %s473, 0.07692308
          %475 = sst [smem:[%s467]] %s474
        $region52: #{tpu_custom_call.1} parent=27 // pred_fallthru
          _
        // Predicated region
        $region53: #{tpu_custom_call.1} parent=27 // pred_check
          %p476 = pneg %p87
        $region54: #{tpu_custom_call.1} parent=27 // pred_check_branch
          %478 = sbr.rel (%p476) target = $region56
        $region55: #{tpu_custom_call.1} parent=27 // pred_region
          %480 = vsyncadd [#allocation7], 0
          %s482 = sshll.u32 %s4, 4
          %s483 = int_to_ptr.hbm [resolvable:$true] %s482
          %485 = dma.smem_to_hbm [#allocation10], 16, %s483, [#allocation7]
        $region56: #{tpu_custom_call.1} parent=27 // pred_fallthru
          _
        // Predicated region
        $region57: #{tpu_custom_call.1} parent=27 // pred_check
          %p486 = pneg %p87
        $region58: #{tpu_custom_call.1} parent=27 // pred_check_branch
          %488 = sbr.rel (%p486) target = $region60
        $region59: #{tpu_custom_call.1} parent=27 // pred_region
          %490 = dma.done [#allocation7], 16
        $region60: #{tpu_custom_call.1} parent=27 // pred_fallthru
          _
        %491 = sfence
      $region28: #{tpu_custom_call.1} parent=5 // pred_fallthru
        _
      %p492 = scmp.le.s32.totalorder 2, %s17
      // Predicated region
      $region61: #{tpu_custom_call.1} parent=5 // pred_check
        %p493 = pneg %p492
      $region62: #{tpu_custom_call.1} parent=5 // pred_check_branch
        %495 = sbr.rel (%p493) target = $region64
      $region63: #{tpu_custom_call.1} parent=5 // pred_region
        %s496 = ssub.s32 %s17, 2
      $region64: #{tpu_custom_call.1} parent=5 // pred_fallthru
        _
    $region6: #{tpu_custom_call.1} parent=1 // loop_footer
      %s21 = sadd.s32 1, %s17
    $region7: #{tpu_custom_call.1} parent=1 // loop_footer_branch
      %16 = sbr.rel target = $region3
    $region8: #{tpu_custom_call.1} parent=1 // loop_exit
      _
    %497 = vsyncpa [#allocation6], 1
    %s498 = scalar_lea.sflag [#allocation6], 1
    %499 = vsyncpa %s498, 1
    %500 = vsyncpa [#allocation9], 1
    %s501 = scalar_lea.sflag [#allocation9], 1
    %502 = vsyncpa %s501, 1
    %503 = vsyncpa [#allocation7], 1
    %s504 = scalar_lea.sflag [#allocation7], 1
    %505 = vsyncpa %s504, 1
  %506 = vsyncmov [#allocation4]
  %s507 = vpop.sfrf %506
  %p508 = scmp.eq.s32.totalorder %s507, 0
  %p509 = pneg %p508
  %511 = shalt.err (%p509)
  %s512 = scalar_lea.sflag [#allocation4], 1
  %513 = vsyncmov %s512
  %s514 = vpop.sfrf %513
  %p515 = scmp.eq.s32.totalorder %s514, 0
  %p516 = pneg %p515
  %518 = shalt.err (%p516)

</llo_original>
